<compile_context>
chip_gen: v7x
topology: tpu7x:2x2x1
jax: 0.10.0
libtpu: 0.0.40
codegen_flags: <defaults>
</compile_context>

<pallas_src>
import functools

import jax
import jax.numpy as jnp
from jax import lax
from jax.experimental import pallas as pl
from jax.experimental.pallas import tpu as pltpu

# ----------------------------- configuration ------------------------------
B = 8                # batch (number of subject/object pairs)
FEATURE_DIM = 32     # feature_dim
PREDICATE_DIM = 16   # predicate_dim
OBJECT_DIM = 24      # object_dim
NUM_LAYERS = 3       # num_layers
APPR_DIM = 256       # appr_module output (fc -> Linear(512, 256))
POS_DIM = 256        # pos_module output (conv3_p -> 256 channels, 1x1 spatial)
BN_EPS = 1e-5


# ------------------------------- kernel -----------------------------------
def drnet_head_kernel(
    num_layers,
    appr_ref,     # [TB, 256] bf16
    pos_ref,      # [TB, 256] bf16
    w0a_ref,      # [256, F]  bf16  BN-folded PhiR_0 weight (appr half)
    w0p_ref,      # [256, F]  bf16  BN-folded PhiR_0 weight (pos half)
    b0_ref,       # [1, F]    f32   BN-folded PhiR_0 bias
    phi_ab_ref,   # [TB, F]   f32   PhiA(one_hot(subj)) + PhiB(one_hot(obj)) + biases
    wR_ref,       # [F, F]    bf16
    wfc_ref,      # [F, P]    bf16
    logits_ref,   # [TB, P]   f32   (predicate selection + bfc applied host-side)
):
    # qr = relu(BatchNorm(PhiR_0(cat([appr, pos], 1))))  (BN folded into w0/b0;
    # the concat is realized as two K=256 MXU pushes into one f32 accumulator).
    acc = jnp.dot(appr_ref[...], w0a_ref[...], preferred_element_type=jnp.float32)
    acc = acc + jnp.dot(pos_ref[...], w0p_ref[...],
                        preferred_element_type=jnp.float32)
    qr = jnp.maximum(acc + b0_ref[...], 0.0)

    # Loop-invariant PhiA(qa)+PhiB(qb)+bR precomputed (row gather == one-hot matmul).
    phi_ab = phi_ab_ref[...]

    # for i in range(num_layers): qr = relu(PhiA(qa) + PhiB(qb) + PhiR(qr))
    # bf16 operands, f32 accumulation (single-pass MXU matmuls).
    for _ in range(num_layers):
        qr = jnp.maximum(
            phi_ab
            + jnp.dot(qr.astype(jnp.bfloat16), wR_ref[...],
                      preferred_element_type=jnp.float32),
            0.0,
        )

    # qr @ wfc (bias + predicate selection done in the wrapper).
    logits_ref[...] = jnp.dot(qr.astype(jnp.bfloat16), wfc_ref[...],
                              preferred_element_type=jnp.float32)


# ------------------------------ wrapper ------------------------------------
def _round_up(x, m):
    return ((x + m - 1) // m) * m


def _pick_row_tile(b):
    """Row tile: multiple of 16 (bf16-native), capped at 1024, >=2 grid steps
    for large batches so both v7x TensorCores get work."""
    padded16 = _round_up(b, 16)
    if padded16 <= 256:
        return padded16                      # single step; fixed overhead dominates
    return min(1024, _round_up(pl.cdiv(padded16, 2), 16))


def drnet_forward(params, subj, obj, appr_feature, pos_feature, predi):
    """DRNet forward for the relational head (backbone outputs are inputs).

    subj, obj, predi : int32 [B]
    appr_feature     : float32 [B, APPR_DIM]   (output of appr_module, eval)
    pos_feature      : float32 [B, POS_DIM]    (output of pos_module, eval)
    returns          : float32 [B]
    """
    b = appr_feature.shape[0]
    feat_dim = params["wR"].shape[0]
    pred_dim = params["wfc"].shape[1]

    # --- host-side folding (all exact in eval mode) -------------------------
    # BatchNorm1d(eval): y = (x - mean) * gamma / sqrt(var+eps) + beta, folded
    # into the PhiR_0 affine map (applied to both weight halves separately).
    scale = params["bn_gamma"] * lax.rsqrt(params["bn_var"] + BN_EPS)   # [1, F]
    w0a = (params["w0_appr"] * scale).astype(jnp.bfloat16)              # [256, F]
    w0p = (params["w0_pos"] * scale).astype(jnp.bfloat16)               # [256, F]
    b0 = (params["b0"] - params["bn_mean"]) * scale + params["bn_beta"]

    # PhiA(one_hot(subj)) + PhiB(one_hot(obj)) + bA + bB + bR, as a row gather.
    subj = subj.astype(jnp.int32)
    obj = obj.astype(jnp.int32)
    phi_ab = (
        params["wA"][subj]
        + params["wB"][obj]
        + (params["bA"] + params["bB"] + params["bR"])
    ).astype(jnp.float32)

    # bf16 for the MXU contractions (f32 accumulation in-kernel).
    appr_bf16 = appr_feature.astype(jnp.bfloat16)
    pos_bf16 = pos_feature.astype(jnp.bfloat16)
    wR_bf16 = params["wR"].astype(jnp.bfloat16)
    wfc_bf16 = params["wfc"].astype(jnp.bfloat16)

    # --- row tiling / padding ----------------------------------------------
    tb = _pick_row_tile(b)
    padded_b = _round_up(b, tb)
    pad = padded_b - b
    if pad:
        appr_bf16 = jnp.pad(appr_bf16, ((0, pad), (0, 0)))
        pos_bf16 = jnp.pad(pos_bf16, ((0, pad), (0, 0)))
        phi_ab = jnp.pad(phi_ab, ((0, pad), (0, 0)))

    grid = (padded_b // tb,)

    logits = pl.pallas_call(
        functools.partial(drnet_head_kernel, NUM_LAYERS),
        out_shape=jax.ShapeDtypeStruct((padded_b, pred_dim), jnp.float32),
        grid_spec=pltpu.PrefetchScalarGridSpec(
            num_scalar_prefetch=0,
            grid=grid,
            in_specs=[
                pl.BlockSpec((tb, APPR_DIM), lambda i: (i, 0)),         # appr
                pl.BlockSpec((tb, POS_DIM), lambda i: (i, 0)),          # pos
                pl.BlockSpec((APPR_DIM, feat_dim), lambda i: (0, 0)),   # w0 appr
                pl.BlockSpec((POS_DIM, feat_dim), lambda i: (0, 0)),    # w0 pos
                pl.BlockSpec((1, feat_dim), lambda i: (0, 0)),          # b0
                pl.BlockSpec((tb, feat_dim), lambda i: (i, 0)),         # phi_ab
                pl.BlockSpec((feat_dim, feat_dim), lambda i: (0, 0)),   # wR
                pl.BlockSpec((feat_dim, pred_dim), lambda i: (0, 0)),   # wfc
            ],
            out_specs=pl.BlockSpec((tb, pred_dim), lambda i: (i, 0)),
        ),
        compiler_params=pltpu.CompilerParams(
            dimension_semantics=("parallel",),
        ),
    )(appr_bf16, pos_bf16, w0a, w0p, b0, phi_ab, wR_bf16, wfc_bf16)

    # sum(fc(qr) * one_hot(predi), 1)  ==  (qr @ wfc)[i, predi_i] + bfc[predi_i]
    # (padded rows hold garbage; slice to the real batch before consuming.)
    predi = predi.astype(jnp.int32)
    picked = jnp.take_along_axis(logits[:b], predi[:, None], axis=1)[:, 0]
    return picked + params["bfc"][0, predi]


# ------------------------- deterministic params -----------------------------
def init_params(key):
    ks = jax.random.split(key, 10)

    def lin(k, fan_in, fan_out):
        scale = 1.0 / jnp.sqrt(jnp.float32(fan_in))
        return jax.random.uniform(
            k, (fan_in, fan_out), jnp.float32, minval=-scale, maxval=scale
        )

    output_size = APPR_DIM + POS_DIM
    w0 = lin(ks[0], output_size, FEATURE_DIM)
    return {
        # PhiR_0, split along its input dim to match cat([appr, pos], 1)
        "w0_appr": w0[:APPR_DIM],
        "w0_pos": w0[APPR_DIM:],
        "b0": jax.random.normal(ks[8], (1, FEATURE_DIM), jnp.float32) * 0.01,
        # BatchNorm1d running stats + affine (eval mode; folded on host)
        "bn_gamma": jnp.ones((1, FEATURE_DIM), jnp.float32) * 1.1,
        "bn_beta": jnp.zeros((1, FEATURE_DIM), jnp.float32) + 0.05,
        "bn_mean": jax.random.normal(ks[9], (1, FEATURE_DIM), jnp.float32) * 0.1,
        "bn_var": jnp.ones((1, FEATURE_DIM), jnp.float32),
        # PhiA / PhiB / PhiR / fc
        "wA": lin(ks[1], OBJECT_DIM, FEATURE_DIM),
        "bA": jax.random.normal(ks[2], (1, FEATURE_DIM), jnp.float32) * 0.01,
        "wB": lin(ks[3], OBJECT_DIM, FEATURE_DIM),
        "bB": jax.random.normal(ks[4], (1, FEATURE_DIM), jnp.float32) * 0.01,
        "wR": lin(ks[5], FEATURE_DIM, FEATURE_DIM),
        "bR": jnp.zeros((1, FEATURE_DIM), jnp.float32),
        "wfc": lin(ks[6], FEATURE_DIM, PREDICATE_DIM),
        "bfc": jax.random.normal(ks[7], (1, PREDICATE_DIM), jnp.float32) * 0.01,
    }


# -------------------------------- main --------------------------------------
if __name__ == "__main__":
    root = jax.random.PRNGKey(0)
    k_par, k_appr, k_pos, k_s, k_o, k_p = jax.random.split(root, 6)

    params = init_params(k_par)

    appr_feature = jax.random.normal(k_appr, (B, APPR_DIM), jnp.float32)
    pos_feature = jax.random.normal(k_pos, (B, POS_DIM), jnp.float32)
    subj = jax.random.randint(k_s, (B,), 0, OBJECT_DIM, jnp.int32)
    obj = jax.random.randint(k_o, (B,), 0, OBJECT_DIM, jnp.int32)
    predi = jax.random.randint(k_p, (B,), 0, PREDICATE_DIM, jnp.int32)

    fwd = jax.jit(drnet_forward)
    out = fwd(params, subj, obj, appr_feature, pos_feature, predi)
    out = jax.block_until_ready(out)
    assert out.shape == (B,) and out.dtype == jnp.float32

    print("KERNEL_OK")
</pallas_src>

<mosaic_0001>
module attributes {stable_mosaic.version = 11 : i64} {
  func.func @drnet_head_kernel(%arg0: i32, %arg1: memref<16x256xbf16, #tpu.memory_space<vmem>>, %arg2: memref<16x256xbf16, #tpu.memory_space<vmem>>, %arg3: memref<256x32xbf16, #tpu.memory_space<vmem>>, %arg4: memref<256x32xbf16, #tpu.memory_space<vmem>>, %arg5: memref<1x32xf32, #tpu.memory_space<vmem>>, %arg6: memref<16x32xf32, #tpu.memory_space<vmem>>, %arg7: memref<32x32xbf16, #tpu.memory_space<vmem>>, %arg8: memref<32x16xbf16, #tpu.memory_space<vmem>>, %arg9: memref<16x16xf32, #tpu.memory_space<vmem>>) attributes {dimension_semantics = [#tpu.dimension_semantics<parallel>], iteration_bounds = array<i64: 1>, scalar_prefetch = 0 : i64, scratch_operands = 0 : i64, tpu.core_type = #tpu.core_type<tc>, window_params = [{transform_indices = @transform_0, window_bounds = array<i64: 16, 256>}, {transform_indices = @transform_1, window_bounds = array<i64: 16, 256>}, {pipeline_mode = #tpu.pipeline_mode<synchronous>, transform_indices = @transform_2, window_bounds = array<i64: 256, 32>}, {pipeline_mode = #tpu.pipeline_mode<synchronous>, transform_indices = @transform_3, window_bounds = array<i64: 256, 32>}, {pipeline_mode = #tpu.pipeline_mode<synchronous>, transform_indices = @transform_4, window_bounds = array<i64: 1, 32>}, {transform_indices = @transform_5, window_bounds = array<i64: 16, 32>}, {pipeline_mode = #tpu.pipeline_mode<synchronous>, transform_indices = @transform_6, window_bounds = array<i64: 32, 32>}, {pipeline_mode = #tpu.pipeline_mode<synchronous>, transform_indices = @transform_7, window_bounds = array<i64: 32, 16>}, {transform_indices = @transform_8, window_bounds = array<i64: 16, 16>}]} {
    %c0 = arith.constant 0 : index
    %c0_0 = arith.constant 0 : index
    %0 = vector.load %arg1[%c0, %c0_0] : memref<16x256xbf16, #tpu.memory_space<vmem>>, vector<16x256xbf16>
    %c0_1 = arith.constant 0 : index
    %c0_2 = arith.constant 0 : index
    %1 = vector.load %arg3[%c0_1, %c0_2] : memref<256x32xbf16, #tpu.memory_space<vmem>>, vector<256x32xbf16>
    %cst = arith.constant dense<0.000000e+00> : vector<16x32xf32>
    %2 = tpu.matmul %0, %1, %cst {dimension_numbers = #tpu.dot_dimension_numbers<[1], [0], [0], [1], [0, 0, 1, 1], [], []>} : vector<16x256xbf16>, vector<256x32xbf16>, vector<16x32xf32> -> vector<16x32xf32>
    %c0_3 = arith.constant 0 : index
    %c0_4 = arith.constant 0 : index
    %3 = vector.load %arg2[%c0_3, %c0_4] : memref<16x256xbf16, #tpu.memory_space<vmem>>, vector<16x256xbf16>
    %c0_5 = arith.constant 0 : index
    %c0_6 = arith.constant 0 : index
    %4 = vector.load %arg4[%c0_5, %c0_6] : memref<256x32xbf16, #tpu.memory_space<vmem>>, vector<256x32xbf16>
    %cst_7 = arith.constant dense<0.000000e+00> : vector<16x32xf32>
    %5 = tpu.matmul %3, %4, %cst_7 {dimension_numbers = #tpu.dot_dimension_numbers<[1], [0], [0], [1], [0, 0, 1, 1], [], []>} : vector<16x256xbf16>, vector<256x32xbf16>, vector<16x32xf32> -> vector<16x32xf32>
    %6 = arith.addf %2, %5 : vector<16x32xf32>
    %c0_8 = arith.constant 0 : index
    %c0_9 = arith.constant 0 : index
    %7 = vector.load %arg5[%c0_8, %c0_9] : memref<1x32xf32, #tpu.memory_space<vmem>>, vector<1x32xf32>
    %8 = vector.broadcast %7 : vector<1x32xf32> to vector<16x32xf32>
    %9 = arith.addf %6, %8 : vector<16x32xf32>
    %cst_10 = arith.constant 0.000000e+00 : f32
    %10 = vector.broadcast %cst_10 : f32 to vector<16x32xf32>
    %11 = arith.maximumf %9, %10 : vector<16x32xf32>
    %c0_11 = arith.constant 0 : index
    %c0_12 = arith.constant 0 : index
    %12 = vector.load %arg6[%c0_11, %c0_12] : memref<16x32xf32, #tpu.memory_space<vmem>>, vector<16x32xf32>
    %13 = arith.truncf %11 : vector<16x32xf32> to vector<16x32xbf16>
    %c0_13 = arith.constant 0 : index
    %c0_14 = arith.constant 0 : index
    %14 = vector.load %arg7[%c0_13, %c0_14] : memref<32x32xbf16, #tpu.memory_space<vmem>>, vector<32x32xbf16>
    %cst_15 = arith.constant dense<0.000000e+00> : vector<16x32xf32>
    %15 = tpu.matmul %13, %14, %cst_15 {dimension_numbers = #tpu.dot_dimension_numbers<[1], [0], [0], [1], [0, 0, 1, 1], [], []>} : vector<16x32xbf16>, vector<32x32xbf16>, vector<16x32xf32> -> vector<16x32xf32>
    %16 = arith.addf %12, %15 : vector<16x32xf32>
    %cst_16 = arith.constant 0.000000e+00 : f32
    %17 = vector.broadcast %cst_16 : f32 to vector<16x32xf32>
    %18 = arith.maximumf %16, %17 : vector<16x32xf32>
    %19 = arith.truncf %18 : vector<16x32xf32> to vector<16x32xbf16>
    %c0_17 = arith.constant 0 : index
    %c0_18 = arith.constant 0 : index
    %20 = vector.load %arg7[%c0_17, %c0_18] : memref<32x32xbf16, #tpu.memory_space<vmem>>, vector<32x32xbf16>
    %cst_19 = arith.constant dense<0.000000e+00> : vector<16x32xf32>
    %21 = tpu.matmul %19, %20, %cst_19 {dimension_numbers = #tpu.dot_dimension_numbers<[1], [0], [0], [1], [0, 0, 1, 1], [], []>} : vector<16x32xbf16>, vector<32x32xbf16>, vector<16x32xf32> -> vector<16x32xf32>
    %22 = arith.addf %12, %21 : vector<16x32xf32>
    %cst_20 = arith.constant 0.000000e+00 : f32
    %23 = vector.broadcast %cst_20 : f32 to vector<16x32xf32>
    %24 = arith.maximumf %22, %23 : vector<16x32xf32>
    %25 = arith.truncf %24 : vector<16x32xf32> to vector<16x32xbf16>
    %c0_21 = arith.constant 0 : index
    %c0_22 = arith.constant 0 : index
    %26 = vector.load %arg7[%c0_21, %c0_22] : memref<32x32xbf16, #tpu.memory_space<vmem>>, vector<32x32xbf16>
    %cst_23 = arith.constant dense<0.000000e+00> : vector<16x32xf32>
    %27 = tpu.matmul %25, %26, %cst_23 {dimension_numbers = #tpu.dot_dimension_numbers<[1], [0], [0], [1], [0, 0, 1, 1], [], []>} : vector<16x32xbf16>, vector<32x32xbf16>, vector<16x32xf32> -> vector<16x32xf32>
    %28 = arith.addf %12, %27 : vector<16x32xf32>
    %cst_24 = arith.constant 0.000000e+00 : f32
    %29 = vector.broadcast %cst_24 : f32 to vector<16x32xf32>
    %30 = arith.maximumf %28, %29 : vector<16x32xf32>
    %31 = arith.truncf %30 : vector<16x32xf32> to vector<16x32xbf16>
    %c0_25 = arith.constant 0 : index
    %c0_26 = arith.constant 0 : index
    %32 = vector.load %arg8[%c0_25, %c0_26] : memref<32x16xbf16, #tpu.memory_space<vmem>>, vector<32x16xbf16>
    %cst_27 = arith.constant dense<0.000000e+00> : vector<16x16xf32>
    %33 = tpu.matmul %31, %32, %cst_27 {dimension_numbers = #tpu.dot_dimension_numbers<[1], [0], [0], [1], [0, 0, 1, 1], [], []>} : vector<16x32xbf16>, vector<32x16xbf16>, vector<16x16xf32> -> vector<16x16xf32>
    %c0_28 = arith.constant 0 : index
    %c0_29 = arith.constant 0 : index
    %34 = vector.load %arg9[%c0_28, %c0_29] : memref<16x16xf32, #tpu.memory_space<vmem>>, vector<16x16xf32>
    tpu.vector_store %arg9[%c0_28, %c0_29], %33 {strides = array<i32>} : memref<16x16xf32, #tpu.memory_space<vmem>>, vector<16x16xf32>,
    return
  }
  func.func @transform_0(%arg0: i32) -> (i32, i32) {
    %c0_i32 = arith.constant 0 : i32
    %c0_i32_0 = arith.constant 0 : i32
    return %arg0, %c0_i32 : i32, i32
  }
  func.func @transform_1(%arg0: i32) -> (i32, i32) {
    %c0_i32 = arith.constant 0 : i32
    %c0_i32_0 = arith.constant 0 : i32
    return %arg0, %c0_i32 : i32, i32
  }
  func.func @transform_2(%arg0: i32) -> (i32, i32) {
    %c0_i32 = arith.constant 0 : i32
    %c0_i32_0 = arith.constant 0 : i32
    %c0_i32_1 = arith.constant 0 : i32
    return %c0_i32, %c0_i32_0 : i32, i32
  }
  func.func @transform_3(%arg0: i32) -> (i32, i32) {
    %c0_i32 = arith.constant 0 : i32
    %c0_i32_0 = arith.constant 0 : i32
    %c0_i32_1 = arith.constant 0 : i32
    return %c0_i32, %c0_i32_0 : i32, i32
  }
  func.func @transform_4(%arg0: i32) -> (i32, i32) {
    %c0_i32 = arith.constant 0 : i32
    %c0_i32_0 = arith.constant 0 : i32
    %c0_i32_1 = arith.constant 0 : i32
    return %c0_i32, %c0_i32_0 : i32, i32
  }
  func.func @transform_5(%arg0: i32) -> (i32, i32) {
    %c0_i32 = arith.constant 0 : i32
    %c0_i32_0 = arith.constant 0 : i32
    return %arg0, %c0_i32 : i32, i32
  }
  func.func @transform_6(%arg0: i32) -> (i32, i32) {
    %c0_i32 = arith.constant 0 : i32
    %c0_i32_0 = arith.constant 0 : i32
    %c0_i32_1 = arith.constant 0 : i32
    return %c0_i32, %c0_i32_0 : i32, i32
  }
  func.func @transform_7(%arg0: i32) -> (i32, i32) {
    %c0_i32 = arith.constant 0 : i32
    %c0_i32_0 = arith.constant 0 : i32
    %c0_i32_1 = arith.constant 0 : i32
    return %c0_i32, %c0_i32_0 : i32, i32
  }
  func.func @transform_8(%arg0: i32) -> (i32, i32) {
    %c0_i32 = arith.constant 0 : i32
    %c0_i32_0 = arith.constant 0 : i32
    return %arg0, %c0_i32 : i32, i32
  }
}

</mosaic_0001>

<llo_original>
// kernel: drnet_forward.1
$region0: #{drnet_forward.1}
  #allocation0 [shape = 'u32[]', space=smem, size = 0x4, offset = 0x4, fixed_abs, tag = 'smem constant byte address 0x4 - core index']
  #allocation1 [shape = 'u32[144,128]{1,0:T(1,128)}', space=vmem, size = 0x12000, scoped, tag = 'internal scratch']
  %s0 = inlined_call_operand.vmem [shape: bf16[16,256], index: 0, kind: input, shape index: {}]
  %s1 = inlined_call_operand.vmem [shape: bf16[16,256], index: 1, kind: input, shape index: {}]
  %s2 = inlined_call_operand.vmem [shape: bf16[256,32], index: 2, kind: input, shape index: {}]
  %s3 = inlined_call_operand.vmem [shape: bf16[256,32], index: 3, kind: input, shape index: {}]
  %s4 = inlined_call_operand.vmem [shape: f32[1,32], index: 4, kind: input, shape index: {}]
  %s5 = inlined_call_operand.vmem [shape: f32[16,32], index: 5, kind: input, shape index: {}]
  %s6 = inlined_call_operand.vmem [shape: bf16[32,32], index: 6, kind: input, shape index: {}]
  %s7 = inlined_call_operand.vmem [shape: bf16[32,16], index: 7, kind: input, shape index: {}]
  %s8 = inlined_call_operand.vmem [shape: f32[16,16], index: 8, kind: output, shape index: {}]
  %s9 = sld [smem:[#allocation0]]
  $region42: #{drnet_forward.1} parent=0
    _
  %s11 = ssub.s32 1, %s9
  %s12 = scalar_select 0, %s11, %s9
  // Predicated region
  $region2: #{drnet_forward.1} parent=0 // pred_check
    _
  $region3: #{drnet_forward.1} parent=0 // pred_check_branch
    %14 = sbr.rel (0) target = $region5
  $region4: #{drnet_forward.1} parent=0 // pred_region
    _
  $region5: #{drnet_forward.1} parent=0 // pred_fallthru
    _
  // Predicated region
  $region6: #{drnet_forward.1} parent=0 // pred_check
    _
  $region7: #{drnet_forward.1} parent=0 // pred_check_branch
    %16 = sbr.rel (0) target = $region9
  $region8: #{drnet_forward.1} parent=0 // pred_region
    _
  $region9: #{drnet_forward.1} parent=0 // pred_fallthru
    _
  // Predicated region
  $region10: #{drnet_forward.1} parent=0 // pred_check
    _
  $region11: #{drnet_forward.1} parent=0 // pred_check_branch
    %18 = sbr.rel (0) target = $region13
  $region12: #{drnet_forward.1} parent=0 // pred_region
    _
  $region13: #{drnet_forward.1} parent=0 // pred_fallthru
    _
  // Predicated region
  $region14: #{drnet_forward.1} parent=0 // pred_check
    _
  $region15: #{drnet_forward.1} parent=0 // pred_check_branch
    %20 = sbr.rel (0) target = $region17
  $region16: #{drnet_forward.1} parent=0 // pred_region
    _
  $region17: #{drnet_forward.1} parent=0 // pred_fallthru
    _
  // Predicated region
  $region18: #{drnet_forward.1} parent=0 // pred_check
    _
  $region19: #{drnet_forward.1} parent=0 // pred_check_branch
    %22 = sbr.rel (0) target = $region21
  $region20: #{drnet_forward.1} parent=0 // pred_region
    _
  $region21: #{drnet_forward.1} parent=0 // pred_fallthru
    _
  // Predicated region
  $region22: #{drnet_forward.1} parent=0 // pred_check
    _
  $region23: #{drnet_forward.1} parent=0 // pred_check_branch
    %24 = sbr.rel (0) target = $region25
  $region24: #{drnet_forward.1} parent=0 // pred_region
    _
  $region25: #{drnet_forward.1} parent=0 // pred_fallthru
    _
  // Predicated region
  $region26: #{drnet_forward.1} parent=0 // pred_check
    _
  $region27: #{drnet_forward.1} parent=0 // pred_check_branch
    %26 = sbr.rel (0) target = $region29
  $region28: #{drnet_forward.1} parent=0 // pred_region
    _
  $region29: #{drnet_forward.1} parent=0 // pred_fallthru
    _
  // Predicated region
  $region30: #{drnet_forward.1} parent=0 // pred_check
    _
  $region31: #{drnet_forward.1} parent=0 // pred_check_branch
    %28 = sbr.rel (0) target = $region33
  $region32: #{drnet_forward.1} parent=0 // pred_region
    _
  $region33: #{drnet_forward.1} parent=0 // pred_fallthru
    _
  %v30 = vld [vmem:[%s0] sm:$0xff]
  %v31 = vld [vmem:[%s0 + $0x8] sm:$0xff]
  %v32 = vld [vmem:[%s2] sm:$0xf]
  %v33 = vld [vmem:[%s2 + $0x4] sm:$0xf]
  %v34 = vld [vmem:[%s2 + $0x8] sm:$0xf]
  %v35 = vld [vmem:[%s2 + $0xc] sm:$0xf]
  %v36 = vld [vmem:[%s2 + $0x10] sm:$0xf]
  %v37 = vld [vmem:[%s2 + $0x14] sm:$0xf]
  %v38 = vld [vmem:[%s2 + $0x18] sm:$0xf]
  %v39 = vld [vmem:[%s2 + $0x1c] sm:$0xf]
  %v40 = vld [vmem:[%s2 + $0x20] sm:$0xf]
  %v41 = vld [vmem:[%s2 + $0x24] sm:$0xf]
  %v42 = vld [vmem:[%s2 + $0x28] sm:$0xf]
  %v43 = vld [vmem:[%s2 + $0x2c] sm:$0xf]
  %v44 = vld [vmem:[%s2 + $0x30] sm:$0xf]
  %v45 = vld [vmem:[%s2 + $0x34] sm:$0xf]
  %v46 = vld [vmem:[%s2 + $0x38] sm:$0xf]
  %v47 = vld [vmem:[%s2 + $0x3c] sm:$0xf]
  %v48 = vld [vmem:[%s2 + $0x40] sm:$0xf]
  %v49 = vld [vmem:[%s2 + $0x44] sm:$0xf]
  %v50 = vld [vmem:[%s2 + $0x48] sm:$0xf]
  %v51 = vld [vmem:[%s2 + $0x4c] sm:$0xf]
  %v52 = vld [vmem:[%s2 + $0x50] sm:$0xf]
  %v53 = vld [vmem:[%s2 + $0x54] sm:$0xf]
  %v54 = vld [vmem:[%s2 + $0x58] sm:$0xf]
  %v55 = vld [vmem:[%s2 + $0x5c] sm:$0xf]
  %v56 = vld [vmem:[%s2 + $0x60] sm:$0xf]
  %v57 = vld [vmem:[%s2 + $0x64] sm:$0xf]
  %v58 = vld [vmem:[%s2 + $0x68] sm:$0xf]
  %v59 = vld [vmem:[%s2 + $0x6c] sm:$0xf]
  %v60 = vld [vmem:[%s2 + $0x70] sm:$0xf]
  %v61 = vld [vmem:[%s2 + $0x74] sm:$0xf]
  %v62 = vld [vmem:[%s2 + $0x78] sm:$0xf]
  %v63 = vld [vmem:[%s2 + $0x7c] sm:$0xf]
  %v64 = vld [vmem:[%s1] sm:$0xff]
  %v65 = vld [vmem:[%s1 + $0x8] sm:$0xff]
  %v66 = vld [vmem:[%s3] sm:$0xf]
  %v67 = vld [vmem:[%s3 + $0x4] sm:$0xf]
  %v68 = vld [vmem:[%s3 + $0x8] sm:$0xf]
  %v69 = vld [vmem:[%s3 + $0xc] sm:$0xf]
  %v70 = vld [vmem:[%s3 + $0x10] sm:$0xf]
  %v71 = vld [vmem:[%s3 + $0x14] sm:$0xf]
  %v72 = vld [vmem:[%s3 + $0x18] sm:$0xf]
  %v73 = vld [vmem:[%s3 + $0x1c] sm:$0xf]
  %v74 = vld [vmem:[%s3 + $0x20] sm:$0xf]
  %v75 = vld [vmem:[%s3 + $0x24] sm:$0xf]
  %v76 = vld [vmem:[%s3 + $0x28] sm:$0xf]
  %v77 = vld [vmem:[%s3 + $0x2c] sm:$0xf]
  %v78 = vld [vmem:[%s3 + $0x30] sm:$0xf]
  %v79 = vld [vmem:[%s3 + $0x34] sm:$0xf]
  %v80 = vld [vmem:[%s3 + $0x38] sm:$0xf]
  %v81 = vld [vmem:[%s3 + $0x3c] sm:$0xf]
  %v82 = vld [vmem:[%s3 + $0x40] sm:$0xf]
  %v83 = vld [vmem:[%s3 + $0x44] sm:$0xf]
  %v84 = vld [vmem:[%s3 + $0x48] sm:$0xf]
  %v85 = vld [vmem:[%s3 + $0x4c] sm:$0xf]
  %v86 = vld [vmem:[%s3 + $0x50] sm:$0xf]
  %v87 = vld [vmem:[%s3 + $0x54] sm:$0xf]
  %v88 = vld [vmem:[%s3 + $0x58] sm:$0xf]
  %v89 = vld [vmem:[%s3 + $0x5c] sm:$0xf]
  %v90 = vld [vmem:[%s3 + $0x60] sm:$0xf]
  %v91 = vld [vmem:[%s3 + $0x64] sm:$0xf]
  %v92 = vld [vmem:[%s3 + $0x68] sm:$0xf]
  %v93 = vld [vmem:[%s3 + $0x6c] sm:$0xf]
  %v94 = vld [vmem:[%s3 + $0x70] sm:$0xf]
  %v95 = vld [vmem:[%s3 + $0x74] sm:$0xf]
  %v96 = vld [vmem:[%s3 + $0x78] sm:$0xf]
  %v97 = vld [vmem:[%s3 + $0x7c] sm:$0xf]
  %v100 = vunpack.c.l.b16 %v64
  %v101 = vunpack.c.h.b16 %v64
  %v102 = vunpack.c.l.b16 %v65
  %v103 = vunpack.c.h.b16 %v65
  %v104 = vpack.c.b16 %v102, %v100
  %v105 = vpack.c.b16 %v103, %v101
  %v140 = vunpack.c.l.b16 %v66
  %v141 = vunpack.c.l.b16 %v67
  %v142 = vunpack.c.l.b16 %v68
  %v143 = vunpack.c.l.b16 %v69
  %v144 = vunpack.c.l.b16 %v70
  %v145 = vunpack.c.l.b16 %v71
  %v146 = vunpack.c.l.b16 %v72
  %v147 = vunpack.c.l.b16 %v73
  %v148 = vunpack.c.l.b16 %v74
  %v149 = vunpack.c.l.b16 %v75
  %v150 = vunpack.c.l.b16 %v76
  %v151 = vunpack.c.l.b16 %v77
  %v152 = vunpack.c.l.b16 %v78
  %v153 = vunpack.c.l.b16 %v79
  %v154 = vunpack.c.l.b16 %v80
  %v155 = vunpack.c.l.b16 %v81
  %v156 = vunpack.c.l.b16 %v82
  %v157 = vunpack.c.l.b16 %v83
  %v158 = vunpack.c.l.b16 %v84
  %v159 = vunpack.c.l.b16 %v85
  %v160 = vunpack.c.l.b16 %v86
  %v161 = vunpack.c.l.b16 %v87
  %v162 = vunpack.c.l.b16 %v88
  %v163 = vunpack.c.l.b16 %v89
  %v164 = vunpack.c.l.b16 %v90
  %v165 = vunpack.c.l.b16 %v91
  %v166 = vunpack.c.l.b16 %v92
  %v167 = vunpack.c.l.b16 %v93
  %v168 = vunpack.c.l.b16 %v94
  %v169 = vunpack.c.l.b16 %v95
  %v170 = vunpack.c.l.b16 %v96
  %v171 = vunpack.c.l.b16 %v97
  %v172 = vpack.c.b16 %v141, %v140
  %v173 = vpack.c.b16 %v143, %v142
  %v174 = vpack.c.b16 %v145, %v144
  %v175 = vpack.c.b16 %v147, %v146
  %v176 = vpack.c.b16 %v149, %v148
  %v177 = vpack.c.b16 %v151, %v150
  %v178 = vpack.c.b16 %v153, %v152
  %v179 = vpack.c.b16 %v155, %v154
  %v180 = vpack.c.b16 %v157, %v156
  %v181 = vpack.c.b16 %v159, %v158
  %v182 = vpack.c.b16 %v161, %v160
  %v183 = vpack.c.b16 %v163, %v162
  %v184 = vpack.c.b16 %v165, %v164
  %v185 = vpack.c.b16 %v167, %v166
  %v186 = vpack.c.b16 %v169, %v168
  %v187 = vpack.c.b16 %v171, %v170
  %204 = vmatprep.subr.bf16.mxu0 0
  %205 = vmatpush1.bf16.msra.mxu0 %v172
  %206 = vmatprep.subr.bf16.mxu0 0
  %207 = vmatpush1.bf16.msra.mxu0 %v173
  %208 = vmatprep.subr.bf16.mxu0 0
  %209 = vmatpush1.bf16.msra.mxu0 %v174
  %210 = vmatprep.subr.bf16.mxu0 0
  %211 = vmatpush1.bf16.msra.mxu0 %v175
  %212 = vmatprep.subr.bf16.mxu0 0
  %213 = vmatpush1.bf16.msra.mxu0 %v176
  %214 = vmatprep.subr.bf16.mxu0 0
  %215 = vmatpush1.bf16.msra.mxu0 %v177
  %216 = vmatprep.subr.bf16.mxu0 0
  %217 = vmatpush1.bf16.msra.mxu0 %v178
  %218 = vmatprep.subr.bf16.mxu0 0
  %219 = vmatpush1.bf16.msra.mxu0 %v179
  %220 = vmatprep.subr.bf16.mxu0 0
  %221 = vmatpush1.bf16.msra.mxu0 %v180
  %222 = vmatprep.subr.bf16.mxu0 0
  %223 = vmatpush1.bf16.msra.mxu0 %v181
  %224 = vmatprep.subr.bf16.mxu0 0
  %225 = vmatpush1.bf16.msra.mxu0 %v182
  %226 = vmatprep.subr.bf16.mxu0 0
  %227 = vmatpush1.bf16.msra.mxu0 %v183
  %228 = vmatprep.subr.bf16.mxu0 0
  %229 = vmatpush1.bf16.msra.mxu0 %v184
  %230 = vmatprep.subr.bf16.mxu0 0
  %231 = vmatpush1.bf16.msra.mxu0 %v185
  %232 = vmatprep.subr.bf16.mxu0 0
  %233 = vmatpush1.bf16.msra.mxu0 %v186
  %234 = vmatprep.subr.bf16.mxu0 0
  %235 = vmatpush1.bf16.msra.mxu0 %v187
  %236 = vmatprep.mubr.bf16.mxu0 %v105
  %237 = vmatmul.mubr.bf16.gmra.mrb[0].mxu0 %v104
  %v238 = vpop.f32.mrb[0].mxu0
  %v239 = vadd.f32 0.0, %v238
  %v240 = vpop.f32.mrb[0].mxu0
  %v241 = vpop.f32.mrb[0].mxu0
  %v242 = vadd.f32 0.0, %v241
  %v243 = vpop.f32.mrb[0].mxu0
  %244 = vdwg.mxu0
  %v247 = vunpack.c.l.b16 %v30
  %v248 = vunpack.c.h.b16 %v30
  %v249 = vunpack.c.l.b16 %v31
  %v250 = vunpack.c.h.b16 %v31
  %v251 = vpack.c.b16 %v249, %v247
  %v252 = vpack.c.b16 %v250, %v248
  %v287 = vunpack.c.l.b16 %v32
  %v288 = vunpack.c.l.b16 %v33
  %v289 = vunpack.c.l.b16 %v34
  %v290 = vunpack.c.l.b16 %v35
  %v291 = vunpack.c.l.b16 %v36
  %v292 = vunpack.c.l.b16 %v37
  %v293 = vunpack.c.l.b16 %v38
  %v294 = vunpack.c.l.b16 %v39
  %v295 = vunpack.c.l.b16 %v40
  %v296 = vunpack.c.l.b16 %v41
  %v297 = vunpack.c.l.b16 %v42
  %v298 = vunpack.c.l.b16 %v43
  %v299 = vunpack.c.l.b16 %v44
  %v300 = vunpack.c.l.b16 %v45
  %v301 = vunpack.c.l.b16 %v46
  %v302 = vunpack.c.l.b16 %v47
  %v303 = vunpack.c.l.b16 %v48
  %v304 = vunpack.c.l.b16 %v49
  %v305 = vunpack.c.l.b16 %v50
  %v306 = vunpack.c.l.b16 %v51
  %v307 = vunpack.c.l.b16 %v52
  %v308 = vunpack.c.l.b16 %v53
  %v309 = vunpack.c.l.b16 %v54
  %v310 = vunpack.c.l.b16 %v55
  %v311 = vunpack.c.l.b16 %v56
  %v312 = vunpack.c.l.b16 %v57
  %v313 = vunpack.c.l.b16 %v58
  %v314 = vunpack.c.l.b16 %v59
  %v315 = vunpack.c.l.b16 %v60
  %v316 = vunpack.c.l.b16 %v61
  %v317 = vunpack.c.l.b16 %v62
  %v318 = vunpack.c.l.b16 %v63
  %v319 = vpack.c.b16 %v288, %v287
  %v320 = vpack.c.b16 %v290, %v289
  %v321 = vpack.c.b16 %v292, %v291
  %v322 = vpack.c.b16 %v294, %v293
  %v323 = vpack.c.b16 %v296, %v295
  %v324 = vpack.c.b16 %v298, %v297
  %v325 = vpack.c.b16 %v300, %v299
  %v326 = vpack.c.b16 %v302, %v301
  %v327 = vpack.c.b16 %v304, %v303
  %v328 = vpack.c.b16 %v306, %v305
  %v329 = vpack.c.b16 %v308, %v307
  %v330 = vpack.c.b16 %v310, %v309
  %v331 = vpack.c.b16 %v312, %v311
  %v332 = vpack.c.b16 %v314, %v313
  %v333 = vpack.c.b16 %v316, %v315
  %v334 = vpack.c.b16 %v318, %v317
  %351 = vmatprep.subr.bf16.mxu0 0
  %352 = vmatpush1.bf16.msra.mxu0 %v319
  %353 = vmatprep.subr.bf16.mxu0 0
  %354 = vmatpush1.bf16.msra.mxu0 %v320
  %355 = vmatprep.subr.bf16.mxu0 0
  %356 = vmatpush1.bf16.msra.mxu0 %v321
  %357 = vmatprep.subr.bf16.mxu0 0
  %358 = vmatpush1.bf16.msra.mxu0 %v322
  %359 = vmatprep.subr.bf16.mxu0 0
  %360 = vmatpush1.bf16.msra.mxu0 %v323
  %361 = vmatprep.subr.bf16.mxu0 0
  %362 = vmatpush1.bf16.msra.mxu0 %v324
  %363 = vmatprep.subr.bf16.mxu0 0
  %364 = vmatpush1.bf16.msra.mxu0 %v325
  %365 = vmatprep.subr.bf16.mxu0 0
  %366 = vmatpush1.bf16.msra.mxu0 %v326
  %367 = vmatprep.subr.bf16.mxu0 0
  %368 = vmatpush1.bf16.msra.mxu0 %v327
  %369 = vmatprep.subr.bf16.mxu0 0
  %370 = vmatpush1.bf16.msra.mxu0 %v328
  %371 = vmatprep.subr.bf16.mxu0 0
  %372 = vmatpush1.bf16.msra.mxu0 %v329
  %373 = vmatprep.subr.bf16.mxu0 0
  %374 = vmatpush1.bf16.msra.mxu0 %v330
  %375 = vmatprep.subr.bf16.mxu0 0
  %376 = vmatpush1.bf16.msra.mxu0 %v331
  %377 = vmatprep.subr.bf16.mxu0 0
  %378 = vmatpush1.bf16.msra.mxu0 %v332
  %379 = vmatprep.subr.bf16.mxu0 0
  %380 = vmatpush1.bf16.msra.mxu0 %v333
  %381 = vmatprep.subr.bf16.mxu0 0
  %382 = vmatpush1.bf16.msra.mxu0 %v334
  %383 = vmatprep.mubr.bf16.mxu0 %v252
  %384 = vmatmul.mubr.bf16.gmra.mrb[0].mxu0 %v251
  %v385 = vpop.f32.mrb[0].mxu0
  %v386 = vadd.f32 %v239, %v385
  %v387 = vpop.f32.mrb[0].mxu0
  %v388 = vpop.f32.mrb[0].mxu0
  %v389 = vadd.f32 %v242, %v388
  %v390 = vpop.f32.mrb[0].mxu0
  %391 = vdwg.mxu0
  %v392 = vld [vmem:[%s4] sm:$0x1]
  %v394 = vlaneseq
  %v395 = vshrl.u32 %v394, 7
  %v396 = vsub.s32 0, %v395
  %v397 = vrot.slane %v392, %v396
  %v399 = vadd.f32 %v386, %v397
  %v400 = vadd.f32 %v389, %v397
  %v401 = vmax.f32 %v399, 0.0
  %v402 = vmax.f32 %v400, 0.0
  %v403 = vld [vmem:[%s5] sm:$0xff]
  %v404 = vld [vmem:[%s5 + $0x8] sm:$0xff]
  %v405 = vpack.c.bf16 %v402, %v401
  %v406 = vld [vmem:[%s6] sm:$0xf]
  %v407 = vld [vmem:[%s6 + $0x4] sm:$0xf]
  %v408 = vld [vmem:[%s6 + $0x8] sm:$0xf]
  %v409 = vld [vmem:[%s6 + $0xc] sm:$0xf]
  %v414 = vunpack.c.l.b16 %v406
  %v415 = vunpack.c.l.b16 %v407
  %v416 = vunpack.c.l.b16 %v408
  %v417 = vunpack.c.l.b16 %v409
  %v418 = vpack.c.b16 %v415, %v414
  %v419 = vpack.c.b16 %v417, %v416
  %vm422 = vcmask 261120
  %v424 = vsel %vm422, %v405, 0
  %426 = vmatprep.subr.bf16.mxu0 0
  %427 = vmatpush1.bf16.msra.mxu0 %v418
  %428 = vmatprep.subr.bf16.mxu0 0
  %429 = vmatpush1.bf16.msra.mxu0 %v419
  %430 = vmatprep.subr.bf16.mxu0 0
  %431 = vmatpush1.bf16.msra.mxu0 0
  %432 = vmatprep.subr.bf16.mxu0 0
  %433 = vmatpush1.bf16.msra.mxu0 0
  %434 = vmatprep.subr.bf16.mxu0 0
  %435 = vmatpush1.bf16.msra.mxu0 0
  %436 = vmatprep.subr.bf16.mxu0 0
  %437 = vmatpush1.bf16.msra.mxu0 0
  %438 = vmatprep.subr.bf16.mxu0 0
  %439 = vmatpush1.bf16.msra.mxu0 0
  %440 = vmatprep.subr.bf16.mxu0 0
  %441 = vmatpush1.bf16.msra.mxu0 0
  %442 = vmatprep.subr.bf16.mxu0 0
  %443 = vmatpush1.bf16.msra.mxu0 0
  %444 = vmatprep.subr.bf16.mxu0 0
  %445 = vmatpush1.bf16.msra.mxu0 0
  %446 = vmatprep.subr.bf16.mxu0 0
  %447 = vmatpush1.bf16.msra.mxu0 0
  %448 = vmatprep.subr.bf16.mxu0 0
  %449 = vmatpush1.bf16.msra.mxu0 0
  %450 = vmatprep.subr.bf16.mxu0 0
  %451 = vmatpush1.bf16.msra.mxu0 0
  %452 = vmatprep.subr.bf16.mxu0 0
  %453 = vmatpush1.bf16.msra.mxu0 0
  %454 = vmatprep.subr.bf16.mxu0 0
  %455 = vmatpush1.bf16.msra.mxu0 0
  %456 = vmatprep.subr.bf16.mxu0 0
  %457 = vmatpush1.bf16.msra.mxu0 0
  %458 = vmatprep.mubr.bf16.mxu0 0
  %459 = vmatmul.mubr.bf16.gmra.mrb[0].mxu0 %v424
  %v460 = vpop.f32.mrb[0].mxu0
  %v461 = vadd.f32 0.0, %v460
  %v462 = vpop.f32.mrb[0].mxu0
  %v463 = vpop.f32.mrb[0].mxu0
  %v464 = vadd.f32 0.0, %v463
  %v465 = vpop.f32.mrb[0].mxu0
  %466 = vdwg.mxu0
  %v467 = vadd.f32 %v403, %v461
  %v468 = vadd.f32 %v404, %v464
  %v469 = vmax.f32 %v467, 0.0
  %v470 = vmax.f32 %v468, 0.0
  %v471 = vpack.c.bf16 %v470, %v469
  %v473 = vsel %vm422, %v471, 0
  %475 = vmatprep.subr.bf16.mxu0 0
  %476 = vmatpush1.bf16.msra.mxu0 %v418
  %477 = vmatprep.subr.bf16.mxu0 0
  %478 = vmatpush1.bf16.msra.mxu0 %v419
  %479 = vmatprep.subr.bf16.mxu0 0
  %480 = vmatpush1.bf16.msra.mxu0 0
  %481 = vmatprep.subr.bf16.mxu0 0
  %482 = vmatpush1.bf16.msra.mxu0 0
  %483 = vmatprep.subr.bf16.mxu0 0
  %484 = vmatpush1.bf16.msra.mxu0 0
  %485 = vmatprep.subr.bf16.mxu0 0
  %486 = vmatpush1.bf16.msra.mxu0 0
  %487 = vmatprep.subr.bf16.mxu0 0
  %488 = vmatpush1.bf16.msra.mxu0 0
  %489 = vmatprep.subr.bf16.mxu0 0
  %490 = vmatpush1.bf16.msra.mxu0 0
  %491 = vmatprep.subr.bf16.mxu0 0
  %492 = vmatpush1.bf16.msra.mxu0 0
  %493 = vmatprep.subr.bf16.mxu0 0
  %494 = vmatpush1.bf16.msra.mxu0 0
  %495 = vmatprep.subr.bf16.mxu0 0
  %496 = vmatpush1.bf16.msra.mxu0 0
  %497 = vmatprep.subr.bf16.mxu0 0
  %498 = vmatpush1.bf16.msra.mxu0 0
  %499 = vmatprep.subr.bf16.mxu0 0
  %500 = vmatpush1.bf16.msra.mxu0 0
  %501 = vmatprep.subr.bf16.mxu0 0
  %502 = vmatpush1.bf16.msra.mxu0 0
  %503 = vmatprep.subr.bf16.mxu0 0
  %504 = vmatpush1.bf16.msra.mxu0 0
  %505 = vmatprep.subr.bf16.mxu0 0
  %506 = vmatpush1.bf16.msra.mxu0 0
  %507 = vmatprep.mubr.bf16.mxu0 0
  %508 = vmatmul.mubr.bf16.gmra.mrb[0].mxu0 %v473
  %v509 = vpop.f32.mrb[0].mxu0
  %v510 = vadd.f32 0.0, %v509
  %v511 = vpop.f32.mrb[0].mxu0
  %v512 = vpop.f32.mrb[0].mxu0
  %v513 = vadd.f32 0.0, %v512
  %v514 = vpop.f32.mrb[0].mxu0
  %515 = vdwg.mxu0
  %v516 = vadd.f32 %v403, %v510
  %v517 = vadd.f32 %v404, %v513
  %v518 = vmax.f32 %v516, 0.0
  %v519 = vmax.f32 %v517, 0.0
  %v520 = vpack.c.bf16 %v519, %v518
  %v522 = vsel %vm422, %v520, 0
  %524 = vmatprep.subr.bf16.mxu0 0
  %525 = vmatpush1.bf16.msra.mxu0 %v418
  %526 = vmatprep.subr.bf16.mxu0 0
  %527 = vmatpush1.bf16.msra.mxu0 %v419
  %528 = vmatprep.subr.bf16.mxu0 0
  %529 = vmatpush1.bf16.msra.mxu0 0
  %530 = vmatprep.subr.bf16.mxu0 0
  %531 = vmatpush1.bf16.msra.mxu0 0
  %532 = vmatprep.subr.bf16.mxu0 0
  %533 = vmatpush1.bf16.msra.mxu0 0
  %534 = vmatprep.subr.bf16.mxu0 0
  %535 = vmatpush1.bf16.msra.mxu0 0
  %536 = vmatprep.subr.bf16.mxu0 0
  %537 = vmatpush1.bf16.msra.mxu0 0
  %538 = vmatprep.subr.bf16.mxu0 0
  %539 = vmatpush1.bf16.msra.mxu0 0
  %540 = vmatprep.subr.bf16.mxu0 0
  %541 = vmatpush1.bf16.msra.mxu0 0
  %542 = vmatprep.subr.bf16.mxu0 0
  %543 = vmatpush1.bf16.msra.mxu0 0
  %544 = vmatprep.subr.bf16.mxu0 0
  %545 = vmatpush1.bf16.msra.mxu0 0
  %546 = vmatprep.subr.bf16.mxu0 0
  %547 = vmatpush1.bf16.msra.mxu0 0
  %548 = vmatprep.subr.bf16.mxu0 0
  %549 = vmatpush1.bf16.msra.mxu0 0
  %550 = vmatprep.subr.bf16.mxu0 0
  %551 = vmatpush1.bf16.msra.mxu0 0
  %552 = vmatprep.subr.bf16.mxu0 0
  %553 = vmatpush1.bf16.msra.mxu0 0
  %554 = vmatprep.subr.bf16.mxu0 0
  %555 = vmatpush1.bf16.msra.mxu0 0
  %556 = vmatprep.mubr.bf16.mxu0 0
  %557 = vmatmul.mubr.bf16.gmra.mrb[0].mxu0 %v522
  %v558 = vpop.f32.mrb[0].mxu0
  %v559 = vadd.f32 0.0, %v558
  %v560 = vpop.f32.mrb[0].mxu0
  %v561 = vpop.f32.mrb[0].mxu0
  %v562 = vadd.f32 0.0, %v561
  %v563 = vpop.f32.mrb[0].mxu0
  %564 = vdwg.mxu0
  %v565 = vadd.f32 %v403, %v559
  %v566 = vadd.f32 %v404, %v562
  %v567 = vmax.f32 %v565, 0.0
  %v568 = vmax.f32 %v566, 0.0
  %v569 = vpack.c.bf16 %v568, %v567
  %v570 = vld [vmem:[%s7] sm:$0xf]
  %v571 = vld [vmem:[%s7 + $0x4] sm:$0xf]
  %v572 = vld [vmem:[%s7 + $0x8] sm:$0xf]
  %v573 = vld [vmem:[%s7 + $0xc] sm:$0xf]
  %v578 = vunpack.c.l.b16 %v570
  %v579 = vunpack.c.l.b16 %v571
  %v580 = vunpack.c.l.b16 %v572
  %v581 = vunpack.c.l.b16 %v573
  %v582 = vpack.c.b16 %v579, %v578
  %v583 = vpack.c.b16 %v581, %v580
  %v587 = vsel %vm422, %v569, 0
  %589 = vmatprep.subr.bf16.mxu0 0
  %590 = vmatpush1.bf16.msra.mxu0 %v582
  %591 = vmatprep.subr.bf16.mxu0 0
  %592 = vmatpush1.bf16.msra.mxu0 %v583
  %593 = vmatprep.subr.bf16.mxu0 0
  %594 = vmatpush1.bf16.msra.mxu0 0
  %595 = vmatprep.subr.bf16.mxu0 0
  %596 = vmatpush1.bf16.msra.mxu0 0
  %597 = vmatprep.subr.bf16.mxu0 0
  %598 = vmatpush1.bf16.msra.mxu0 0
  %599 = vmatprep.subr.bf16.mxu0 0
  %600 = vmatpush1.bf16.msra.mxu0 0
  %601 = vmatprep.subr.bf16.mxu0 0
  %602 = vmatpush1.bf16.msra.mxu0 0
  %603 = vmatprep.subr.bf16.mxu0 0
  %604 = vmatpush1.bf16.msra.mxu0 0
  %605 = vmatprep.subr.bf16.mxu0 0
  %606 = vmatpush1.bf16.msra.mxu0 0
  %607 = vmatprep.subr.bf16.mxu0 0
  %608 = vmatpush1.bf16.msra.mxu0 0
  %609 = vmatprep.subr.bf16.mxu0 0
  %610 = vmatpush1.bf16.msra.mxu0 0
  %611 = vmatprep.subr.bf16.mxu0 0
  %612 = vmatpush1.bf16.msra.mxu0 0
  %613 = vmatprep.subr.bf16.mxu0 0
  %614 = vmatpush1.bf16.msra.mxu0 0
  %615 = vmatprep.subr.bf16.mxu0 0
  %616 = vmatpush1.bf16.msra.mxu0 0
  %617 = vmatprep.subr.bf16.mxu0 0
  %618 = vmatpush1.bf16.msra.mxu0 0
  %619 = vmatprep.subr.bf16.mxu0 0
  %620 = vmatpush1.bf16.msra.mxu0 0
  %621 = vmatprep.mubr.bf16.mxu0 0
  %622 = vmatmul.mubr.bf16.gmra.mrb[0].mxu0 %v587
  %v623 = vpop.f32.mrb[0].mxu0
  %v624 = vadd.f32 0.0, %v623
  %v625 = vpop.f32.mrb[0].mxu0
  %v626 = vpop.f32.mrb[0].mxu0
  %v627 = vadd.f32 0.0, %v626
  %v628 = vpop.f32.mrb[0].mxu0
  %629 = vdwg.mxu0
  %vm630 = vcmask 130048
  %631 = vst.msk [vmem:[%s8] sm:$0xff] %vm630, %v624
  %632 = vst.msk [vmem:[%s8 + $0x8] sm:$0xff] %vm630, %v627
  // Predicated region
  $region34: #{drnet_forward.1} parent=0 // pred_check
    _
  $region35: #{drnet_forward.1} parent=0 // pred_check_branch
    %634 = sbr.rel (0) target = $region37
  $region36: #{drnet_forward.1} parent=0 // pred_region
    _
  $region37: #{drnet_forward.1} parent=0 // pred_fallthru
    _
  // Predicated region
  $region38: #{drnet_forward.1} parent=0 // pred_check
    _
  $region39: #{drnet_forward.1} parent=0 // pred_check_branch
    %636 = sbr.rel (0) target = $region41
  $region40: #{drnet_forward.1} parent=0 // pred_region
    _
  $region41: #{drnet_forward.1} parent=0 // pred_fallthru
    _

</llo_original>
